<compile_context>
chip_gen: v5e
topology: v5e:2x2
jax: 0.10.0
libtpu: 0.0.40
codegen_flags: <defaults>
</compile_context>

<pallas_src>
import functools

import jax
import jax.numpy as jnp
from jax.experimental import pallas as pl
from jax.experimental.pallas import tpu as pltpu


def _soft_dice_rows_kernel(x_ref, y_ref, dc_ref, tp_acc, sx_acc, sy_acc, *, smooth):
    """Grid = (row_blocks, spatial_chunks); spatial axis is the reduction."""
    k = pl.program_id(1)

    @pl.when(k == 0)
    def _init():
        tp_acc[...] = jnp.zeros_like(tp_acc)
        sx_acc[...] = jnp.zeros_like(sx_acc)
        sy_acc[...] = jnp.zeros_like(sy_acc)

    x = x_ref[...].astype(jnp.float32)
    y = y_ref[...].astype(jnp.float32)

    # Per-row partial sums over this spatial chunk (one XLU reduce each).
    tp_acc[...] += jnp.sum(x * y, axis=-1, keepdims=True)
    sx_acc[...] += jnp.sum(x, axis=-1, keepdims=True)
    sy_acc[...] += jnp.sum(y, axis=-1, keepdims=True)

    @pl.when(k == pl.num_programs(1) - 1)
    def _finalize():
        # fp + fn + 2*tp == sum(x) + sum(y)  (exact), so:
        tp = tp_acc[...]
        dc_ref[...] = (2.0 * tp + smooth) / (sx_acc[...] + sy_acc[...] + smooth)


def soft_dice_loss(x, y, *, smooth=1.0):
    """x: (B, C, H, W) probabilities; y: (B, C, H, W) one-hot. Returns scalar loss."""
    B, C, H, W = x.shape
    R = B * C
    S = H * W

    y = y.astype(x.dtype)
    itemsize = jnp.dtype(x.dtype).itemsize
    # Sublane-aligned row blocks (f32: 8, bf16/f16: 16, int8/fp8: 32).
    sublane = {4: 8, 2: 16, 1: 32}.get(itemsize, 8)
    ROW_BLOCK = sublane
    R_pad = pl.cdiv(R, ROW_BLOCK) * ROW_BLOCK

    # Large lane-dense spatial tiles (8 x 8192 f32 = 256 KiB per buffer).
    MAX_TILE_S = 8192
    if S >= MAX_TILE_S:
        TILE_S = MAX_TILE_S
    else:
        TILE_S = pl.cdiv(S, 128) * 128
    S_pad = pl.cdiv(S, TILE_S) * TILE_S

    x_flat = x.reshape(R, S)
    y_flat = y.reshape(R, S)
    pad_r = R_pad - R
    pad_s = S_pad - S
    if pad_r or pad_s:
        # Zero padding is exact for sum(x), sum(y), sum(x*y); padded rows are
        # sliced away before the final mean.
        x_flat = jnp.pad(x_flat, ((0, pad_r), (0, pad_s)))
        y_flat = jnp.pad(y_flat, ((0, pad_r), (0, pad_s)))

    num_row_blocks = R_pad // ROW_BLOCK
    num_chunks = S_pad // TILE_S

    kernel = functools.partial(_soft_dice_rows_kernel, smooth=float(smooth))

    cost = pl.CostEstimate(
        flops=3 * R * S,                                   # mul + 2 adds / element (approx)
        transcendentals=0,
        bytes_accessed=2 * R_pad * S_pad * itemsize + R_pad * 4,
    )

    dc = pl.pallas_call(
        kernel,
        out_shape=jax.ShapeDtypeStruct((R_pad, 1), jnp.float32),
        grid_spec=pltpu.PrefetchScalarGridSpec(
            num_scalar_prefetch=0,
            grid=(num_row_blocks, num_chunks),
            in_specs=[
                pl.BlockSpec((ROW_BLOCK, TILE_S), lambda i, k: (i, k)),
                pl.BlockSpec((ROW_BLOCK, TILE_S), lambda i, k: (i, k)),
            ],
            out_specs=pl.BlockSpec((ROW_BLOCK, 1), lambda i, k: (i, 0)),
            scratch_shapes=[
                pltpu.VMEM((ROW_BLOCK, 1), jnp.float32),   # tp accumulator
                pltpu.VMEM((ROW_BLOCK, 1), jnp.float32),   # sum(x) accumulator
                pltpu.VMEM((ROW_BLOCK, 1), jnp.float32),   # sum(y) accumulator
            ],
        ),
        compiler_params=pltpu.CompilerParams(
            dimension_semantics=("parallel", "arbitrary"),
        ),
        cost_estimate=cost,
    )(x_flat, y_flat)

    # do_bg=True, batch_dice=False -> mean over all (b, c) dice values, negated.
    # Tiny O(B*C) epilogue; padded rows are excluded here.
    return -jnp.mean(dc[:R, 0])


def _reference_soft_dice(x, y, smooth=1.0):
    # Pure-JAX reference mirroring the PyTorch module (batch_dice=False,
    # do_bg=True, square=False, no mask, no nonlin).
    axes = (2, 3)
    tp = jnp.sum(x * y, axis=axes)
    fp = jnp.sum(x * (1.0 - y), axis=axes)
    fn = jnp.sum((1.0 - x) * y, axis=axes)
    dc = (2.0 * tp + smooth) / (2.0 * tp + fp + fn + smooth)
    return -jnp.mean(dc)


if __name__ == "__main__":
    key = jax.random.PRNGKey(0)
    kx, ky = jax.random.split(key)

    B, C, H, W = 2, 4, 16, 16
    # Network output in [0, 1] (as if a nonlinearity had been applied upstream).
    x = jax.random.uniform(kx, (B, C, H, W), dtype=jnp.float32)
    # Ground-truth label map -> one-hot encoding with same shape as x.
    labels = jax.random.randint(ky, (B, H, W), 0, C)
    y = jax.nn.one_hot(labels, C, axis=1, dtype=jnp.float32)  # (B, C, H, W)

    loss = soft_dice_loss(x, y, smooth=1.0)
    loss = jax.block_until_ready(loss)

    ref = _reference_soft_dice(x, y, smooth=1.0)
    assert jnp.allclose(loss, ref, atol=1e-5, rtol=1e-5), (loss, ref)

    print("KERNEL_OK")
</pallas_src>

<mosaic_0001>
module attributes {stable_mosaic.version = 11 : i64} {
  func.func @_soft_dice_rows_kernel(%arg0: i32, %arg1: i32, %arg2: memref<8x256xf32, #tpu.memory_space<vmem>>, %arg3: memref<8x256xf32, #tpu.memory_space<vmem>>, %arg4: memref<8x1xf32, #tpu.memory_space<vmem>>, %arg5: memref<8x1xf32, #tpu.memory_space<vmem>>, %arg6: memref<8x1xf32, #tpu.memory_space<vmem>>, %arg7: memref<8x1xf32, #tpu.memory_space<vmem>>) attributes {dimension_semantics = [#tpu.dimension_semantics<parallel>, #tpu.dimension_semantics<arbitrary>], iteration_bounds = array<i64: 1, 1>, scalar_prefetch = 0 : i64, scratch_operands = 3 : i64, tpu.core_type = #tpu.core_type<tc>, window_params = [{transform_indices = @transform_0, window_bounds = array<i64: 8, 256>}, {transform_indices = @transform_1, window_bounds = array<i64: 8, 256>}, {transform_indices = @transform_2, window_bounds = array<i64: 8, 1>}]} {
    %c0_i32 = arith.constant 0 : i32
    %0 = arith.cmpi eq, %arg1, %c0_i32 : i32
    %1 = arith.extui %0 : i1 to i32
    %c0_i32_0 = arith.constant 0 : i32
    %2 = arith.cmpi ne, %1, %c0_i32_0 : i32
    scf.if %2 {
      %cst_20 = arith.constant 0.000000e+00 : f32
      %24 = vector.broadcast %cst_20 : f32 to vector<8x1xf32>
      %c0_21 = arith.constant 0 : index
      %c0_22 = arith.constant 0 : index
      %25 = vector.load %arg5[%c0_21, %c0_22] : memref<8x1xf32, #tpu.memory_space<vmem>>, vector<8x1xf32>
      tpu.vector_store %arg5[%c0_21, %c0_22], %24 {strides = array<i32>} : memref<8x1xf32, #tpu.memory_space<vmem>>, vector<8x1xf32>,
      %cst_23 = arith.constant 0.000000e+00 : f32
      %26 = vector.broadcast %cst_23 : f32 to vector<8x1xf32>
      %c0_24 = arith.constant 0 : index
      %c0_25 = arith.constant 0 : index
      %27 = vector.load %arg6[%c0_24, %c0_25] : memref<8x1xf32, #tpu.memory_space<vmem>>, vector<8x1xf32>
      tpu.vector_store %arg6[%c0_24, %c0_25], %26 {strides = array<i32>} : memref<8x1xf32, #tpu.memory_space<vmem>>, vector<8x1xf32>,
      %cst_26 = arith.constant 0.000000e+00 : f32
      %28 = vector.broadcast %cst_26 : f32 to vector<8x1xf32>
      %c0_27 = arith.constant 0 : index
      %c0_28 = arith.constant 0 : index
      %29 = vector.load %arg7[%c0_27, %c0_28] : memref<8x1xf32, #tpu.memory_space<vmem>>, vector<8x1xf32>
      tpu.vector_store %arg7[%c0_27, %c0_28], %28 {strides = array<i32>} : memref<8x1xf32, #tpu.memory_space<vmem>>, vector<8x1xf32>,
    } else {
    }
    %c0 = arith.constant 0 : index
    %c0_1 = arith.constant 0 : index
    %3 = vector.load %arg2[%c0, %c0_1] : memref<8x256xf32, #tpu.memory_space<vmem>>, vector<8x256xf32>
    %c0_2 = arith.constant 0 : index
    %c0_3 = arith.constant 0 : index
    %4 = vector.load %arg3[%c0_2, %c0_3] : memref<8x256xf32, #tpu.memory_space<vmem>>, vector<8x256xf32>
    %c0_4 = arith.constant 0 : index
    %c0_5 = arith.constant 0 : index
    %5 = vector.load %arg5[%c0_4, %c0_5] : memref<8x1xf32, #tpu.memory_space<vmem>>, vector<8x1xf32>
    %6 = arith.mulf %3, %4 : vector<8x256xf32>
    %cst = arith.constant dense<0.000000e+00> : vector<8xf32>
    %7 = vector.multi_reduction <add>, %6, %cst [1] : vector<8x256xf32> to vector<8xf32>
    %8 = vector.shape_cast %7 : vector<8xf32> to vector<8x1xf32>
    %9 = arith.addf %5, %8 : vector<8x1xf32>
    %c0_6 = arith.constant 0 : index
    %c0_7 = arith.constant 0 : index
    %10 = vector.load %arg5[%c0_6, %c0_7] : memref<8x1xf32, #tpu.memory_space<vmem>>, vector<8x1xf32>
    tpu.vector_store %arg5[%c0_6, %c0_7], %9 {strides = array<i32>} : memref<8x1xf32, #tpu.memory_space<vmem>>, vector<8x1xf32>,
    %c0_8 = arith.constant 0 : index
    %c0_9 = arith.constant 0 : index
    %11 = vector.load %arg6[%c0_8, %c0_9] : memref<8x1xf32, #tpu.memory_space<vmem>>, vector<8x1xf32>
    %cst_10 = arith.constant dense<0.000000e+00> : vector<8xf32>
    %12 = vector.multi_reduction <add>, %3, %cst_10 [1] : vector<8x256xf32> to vector<8xf32>
    %13 = vector.shape_cast %12 : vector<8xf32> to vector<8x1xf32>
    %14 = arith.addf %11, %13 : vector<8x1xf32>
    %c0_11 = arith.constant 0 : index
    %c0_12 = arith.constant 0 : index
    %15 = vector.load %arg6[%c0_11, %c0_12] : memref<8x1xf32, #tpu.memory_space<vmem>>, vector<8x1xf32>
    tpu.vector_store %arg6[%c0_11, %c0_12], %14 {strides = array<i32>} : memref<8x1xf32, #tpu.memory_space<vmem>>, vector<8x1xf32>,
    %c0_13 = arith.constant 0 : index
    %c0_14 = arith.constant 0 : index
    %16 = vector.load %arg7[%c0_13, %c0_14] : memref<8x1xf32, #tpu.memory_space<vmem>>, vector<8x1xf32>
    %cst_15 = arith.constant dense<0.000000e+00> : vector<8xf32>
    %17 = vector.multi_reduction <add>, %4, %cst_15 [1] : vector<8x256xf32> to vector<8xf32>
    %18 = vector.shape_cast %17 : vector<8xf32> to vector<8x1xf32>
    %19 = arith.addf %16, %18 : vector<8x1xf32>
    %c0_16 = arith.constant 0 : index
    %c0_17 = arith.constant 0 : index
    %20 = vector.load %arg7[%c0_16, %c0_17] : memref<8x1xf32, #tpu.memory_space<vmem>>, vector<8x1xf32>
    tpu.vector_store %arg7[%c0_16, %c0_17], %19 {strides = array<i32>} : memref<8x1xf32, #tpu.memory_space<vmem>>, vector<8x1xf32>,
    %c0_i32_18 = arith.constant 0 : i32
    %21 = arith.cmpi eq, %arg1, %c0_i32_18 : i32
    %22 = arith.extui %21 : i1 to i32
    %c0_i32_19 = arith.constant 0 : i32
    %23 = arith.cmpi ne, %22, %c0_i32_19 : i32
    scf.if %23 {
      %c0_20 = arith.constant 0 : index
      %c0_21 = arith.constant 0 : index
      %24 = vector.load %arg5[%c0_20, %c0_21] : memref<8x1xf32, #tpu.memory_space<vmem>>, vector<8x1xf32>
      %cst_22 = arith.constant 2.000000e+00 : f32
      %25 = vector.broadcast %cst_22 : f32 to vector<8x1xf32>
      %26 = arith.mulf %25, %24 : vector<8x1xf32>
      %cst_23 = arith.constant 1.000000e+00 : f32
      %27 = vector.broadcast %cst_23 : f32 to vector<8x1xf32>
      %28 = arith.addf %26, %27 : vector<8x1xf32>
      %c0_24 = arith.constant 0 : index
      %c0_25 = arith.constant 0 : index
      %29 = vector.load %arg6[%c0_24, %c0_25] : memref<8x1xf32, #tpu.memory_space<vmem>>, vector<8x1xf32>
      %c0_26 = arith.constant 0 : index
      %c0_27 = arith.constant 0 : index
      %30 = vector.load %arg7[%c0_26, %c0_27] : memref<8x1xf32, #tpu.memory_space<vmem>>, vector<8x1xf32>
      %31 = arith.addf %29, %30 : vector<8x1xf32>
      %cst_28 = arith.constant 1.000000e+00 : f32
      %32 = vector.broadcast %cst_28 : f32 to vector<8x1xf32>
      %33 = arith.addf %31, %32 : vector<8x1xf32>
      %34 = arith.divf %28, %33 : vector<8x1xf32>
      %c0_29 = arith.constant 0 : index
      %c0_30 = arith.constant 0 : index
      %35 = vector.load %arg4[%c0_29, %c0_30] : memref<8x1xf32, #tpu.memory_space<vmem>>, vector<8x1xf32>
      tpu.vector_store %arg4[%c0_29, %c0_30], %34 {strides = array<i32>} : memref<8x1xf32, #tpu.memory_space<vmem>>, vector<8x1xf32>,
    } else {
    }
    return
  }
  func.func @transform_0(%arg0: i32, %arg1: i32) -> (i32, i32) {
    %c0_i32 = arith.constant 0 : i32
    return %arg0, %arg1 : i32, i32
  }
  func.func @transform_1(%arg0: i32, %arg1: i32) -> (i32, i32) {
    %c0_i32 = arith.constant 0 : i32
    return %arg0, %arg1 : i32, i32
  }
  func.func @transform_2(%arg0: i32, %arg1: i32) -> (i32, i32) {
    %c0_i32 = arith.constant 0 : i32
    %c0_i32_0 = arith.constant 0 : i32
    return %arg0, %c0_i32 : i32, i32
  }
}

</mosaic_0001>

<llo_original>
// kernel: tpu_custom_call.1
$region0: #{tpu_custom_call.1}
  #allocation0 [shape = 'u32[]', space=smem, size = 0x4, offset = 0x4, fixed_abs, tag = 'smem constant byte address 0x4 - core index']
  #allocation1 [shape = 'u32[72,128]{1,0:T(1,128)}', space=vmem, size = 0x9000, scoped, tag = 'internal scratch']
  #allocation2 [shape = 'f32[8,1]{1,0:T(8,128)}', space=vmem, size = 0x1000, scoped, tag = 'scratch operand']
  #allocation3 [shape = 'f32[8,1]{1,0:T(8,128)}', space=vmem, size = 0x1000, scoped, tag = 'scratch operand']
  #allocation4 [shape = 'f32[8,1]{1,0:T(8,128)}', space=vmem, size = 0x1000, scoped, tag = 'scratch operand']
  %s0 = inlined_call_operand.hbm [shape: f32[8,256], index: 0, kind: input, shape index: {}]
  %s1 = inlined_call_operand.hbm [shape: f32[8,256], index: 1, kind: input, shape index: {}]
  %s2 = inlined_call_operand.vmem [shape: f32[8,1], index: 2, kind: output, shape index: {}]
  %s3 = sld [smem:[#allocation0]]
  $region34: #{tpu_custom_call.1} parent=0
    _
  %s5 = ssub.s32 1, %s3
  %s6 = scalar_select 0, %s5, %s3
  $region1: #{tpu_custom_call.1} parent=0
    #allocation5 [shape = 'u8[8192]{0}', space=vmem, size = 0x2000, scoped, tag = 'input window, operand 0, single buffered']
    #allocation6 [shape = 's32[1]{0}', space=sflag, size = 0x4, scoped, tag = 'scoped memory for tpu_custom_call.1']
    #allocation7 [shape = 'u8[8192]{0}', space=vmem, size = 0x2000, scoped, tag = 'input window, operand 1, single buffered']
    #allocation8 [shape = 's32[1]{0}', space=sflag, size = 0x4, scoped, tag = 'scoped memory for tpu_custom_call.1']
    %7 = vsyncpa [#allocation6], 0
    %8 = vsyncpa [#allocation8], 0
    // Predicated region
    $region2: #{tpu_custom_call.1} parent=1 // pred_check
      _
    $region3: #{tpu_custom_call.1} parent=1 // pred_check_branch
      %10 = sbr.rel (0) target = $region5
    $region4: #{tpu_custom_call.1} parent=1 // pred_region
      %12 = vsyncadd [#allocation6], 0
      %s14 = sshll.u32 %s0, 4
      %s15 = int_to_ptr.hbm [resolvable:$true] %s14
      %s16 = sshll.u32 [#allocation5], 4
      %s17 = int_to_ptr.vmem [resolvable:$true] %s16
      %19 = dma.hbm_to_vmem [thread:$0]  %s15, 256, %s17, [#allocation6]
    $region5: #{tpu_custom_call.1} parent=1 // pred_fallthru
      _
    // Predicated region
    $region6: #{tpu_custom_call.1} parent=1 // pred_check
      _
    $region7: #{tpu_custom_call.1} parent=1 // pred_check_branch
      %21 = sbr.rel (0) target = $region9
    $region8: #{tpu_custom_call.1} parent=1 // pred_region
      %23 = vsyncadd [#allocation8], 0
      %s25 = sshll.u32 %s1, 4
      %s26 = int_to_ptr.hbm [resolvable:$true] %s25
      %s27 = sshll.u32 [#allocation7], 4
      %s28 = int_to_ptr.vmem [resolvable:$true] %s27
      %30 = dma.hbm_to_vmem [thread:$0]  %s26, 256, %s28, [#allocation8]
    $region9: #{tpu_custom_call.1} parent=1 // pred_fallthru
      _
    // Predicated region
    $region10: #{tpu_custom_call.1} parent=1 // pred_check
      _
    $region11: #{tpu_custom_call.1} parent=1 // pred_check_branch
      %32 = sbr.rel (0) target = $region13
    $region12: #{tpu_custom_call.1} parent=1 // pred_region
      %34 = dma.done [#allocation6], 256
    $region13: #{tpu_custom_call.1} parent=1 // pred_fallthru
      _
    // Predicated region
    $region14: #{tpu_custom_call.1} parent=1 // pred_check
      _
    $region15: #{tpu_custom_call.1} parent=1 // pred_check_branch
      %36 = sbr.rel (0) target = $region17
    $region16: #{tpu_custom_call.1} parent=1 // pred_region
      %38 = dma.done [#allocation8], 256
    $region17: #{tpu_custom_call.1} parent=1 // pred_fallthru
      _
    %p39 = scmp.eq.s32.totalorder 0, 0
    // Predicated region
    $region18: #{tpu_custom_call.1} parent=1 // pred_check
      %p40 = pneg %p39
    $region19: #{tpu_custom_call.1} parent=1 // pred_check_branch
      %42 = sbr.rel (%p40) target = $region21
    $region20: #{tpu_custom_call.1} parent=1 // pred_region
      %vm43 = vcmask 7168
      %44 = vst.msk [vmem:[#allocation2] sm:$0xff] %vm43, 0.0
      %45 = vst.msk [vmem:[#allocation3] sm:$0xff] %vm43, 0.0
      %46 = vst.msk [vmem:[#allocation4] sm:$0xff] %vm43, 0.0
    $region21: #{tpu_custom_call.1} parent=1 // pred_fallthru
      _
    %v47 = vld [vmem:[#allocation5] sm:$0xff]
    %v48 = vld [vmem:[#allocation5 + $0x8] sm:$0xff]
    %v49 = vld [vmem:[#allocation7] sm:$0xff]
    %v50 = vld [vmem:[#allocation7 + $0x8] sm:$0xff]
    %v51 = vld [vmem:[#allocation2] sm:$0xff]
    %v52 = vmul.f32 %v47, %v49
    %v53 = vmul.f32 %v48, %v50
    %v54 = vadd.f32 %v52, %v53
    %55 = vadd.xlane.f32.xlu0 %v54
    %v56 = vpop.xlane.xlu0 %55
    %v57 = vadd.f32 %v51, %v56
    %vm58 = vcmask 7168
    %59 = vst.msk [vmem:[#allocation2] sm:$0xff] %vm58, %v57
    %v60 = vld [vmem:[#allocation3] sm:$0xff]
    %v61 = vadd.f32 %v47, %v48
    %62 = vadd.xlane.f32.xlu0 %v61
    %v63 = vpop.xlane.xlu0 %62
    %v64 = vadd.f32 %v60, %v63
    %65 = vst.msk [vmem:[#allocation3] sm:$0xff] %vm58, %v64
    %v66 = vld [vmem:[#allocation4] sm:$0xff]
    %v67 = vadd.f32 %v49, %v50
    %68 = vadd.xlane.f32.xlu0 %v67
    %v69 = vpop.xlane.xlu0 %68
    %v70 = vadd.f32 %v66, %v69
    %71 = vst.msk [vmem:[#allocation4] sm:$0xff] %vm58, %v70
    // Predicated region
    $region22: #{tpu_custom_call.1} parent=1 // pred_check
      %p72 = pneg %p39
    $region23: #{tpu_custom_call.1} parent=1 // pred_check_branch
      %74 = sbr.rel (%p72) target = $region25
    $region24: #{tpu_custom_call.1} parent=1 // pred_region
      %v75 = vld [vmem:[#allocation2] sm:$0xff]
      %v76 = vmul.f32 %v75, 2.0
      %v77 = vadd.f32 %v76, 1.0
      %v78 = vld [vmem:[#allocation3] sm:$0xff]
      %v79 = vld [vmem:[#allocation4] sm:$0xff]
      %v80 = vadd.f32 %v78, %v79
      %v81 = vadd.f32 %v80, 1.0
      %v82 = vrcp.pop %v81
      %v83 = vmul.f32 %v81, %v82
      %v84 = vsub.f32 1.0, %v83
      %v85 = vmul.f32 %v82, %v84
      %v86 = vadd.f32 %v82, %v85
      %vm87 = vweird.f32 %v81
      %vm88 = vweird.f32 %v82
      %vm89 = vmor %vm87, %vm88
      %v90 = vsel %vm89, %v82, %v86
      %v91 = vand.u32 2147483647, %v81
      %vm92 = vcmp.eq.f32.partialorder %v91, 8.507059e+37
      %v93 = vand.u32 %v81, 2147483648
      %v94 = vor.u32 1.1754944e-38, %v93
      %v95 = vsel %vm92, %v94, %v90
      %v96 = vmul.f32 %v77, %v95
      %97 = vst.msk [vmem:[%s2] sm:$0xff] %vm58, %v96
    $region25: #{tpu_custom_call.1} parent=1 // pred_fallthru
      _
    // Predicated region
    $region26: #{tpu_custom_call.1} parent=1 // pred_check
      _
    $region27: #{tpu_custom_call.1} parent=1 // pred_check_branch
      %99 = sbr.rel (0) target = $region29
    $region28: #{tpu_custom_call.1} parent=1 // pred_region
      _
    $region29: #{tpu_custom_call.1} parent=1 // pred_fallthru
      _
    // Predicated region
    $region30: #{tpu_custom_call.1} parent=1 // pred_check
      _
    $region31: #{tpu_custom_call.1} parent=1 // pred_check_branch
      %101 = sbr.rel (0) target = $region33
    $region32: #{tpu_custom_call.1} parent=1 // pred_region
      _
    $region33: #{tpu_custom_call.1} parent=1 // pred_fallthru
      _
    %102 = vsyncpa [#allocation6], 1
    %103 = vsyncpa [#allocation8], 1

</llo_original>
